<compile_context>
chip_gen: v7x
topology: tpu7x:2x2x1
jax: 0.10.0
libtpu: 0.0.40
codegen_flags: <defaults>
</compile_context>

<pallas_src>
import jax
import jax.numpy as jnp
from jax.experimental import pallas as pl
from jax.experimental.pallas import tpu as pltpu

NUM_OPS_STAGE1 = 6      # len(nlp_operations())
NUM_OPS_STAGE2 = 3      # len(nlp_operations2())
OPERATION_COUNT = 2
NUM_SUB_POLICIES = 3
TEMPERATURE = 0.05

MXU_DTYPE = jnp.bfloat16


# ----------------------------------------------------------------------------
# Pallas kernel: fused two-stage affine apply on one row tile
#   y = ((x @ W1[i1] + b1[i1]) * s1) @ W2[i2] + b2[i2]) * s2
# ----------------------------------------------------------------------------
def _fused_subpolicy_kernel(idx_ref, scale_ref, x_ref, w1_ref, b1_ref,
                            w2_ref, b2_ref, o_ref):
    del idx_ref  # consumed by the index_maps (data-dependent W/b slice DMA)
    # In-kernel f32 -> bf16 cast: hides under the DMA/MXU pipeline instead of
    # being a standalone XLA pass over the whole activation in HBM.
    x = x_ref[...].astype(MXU_DTYPE)
    h = jnp.dot(x, w1_ref[...], preferred_element_type=jnp.float32)
    h = (h + b1_ref[...]) * scale_ref[0]          # f32 bias/scale (v5e VPU)
    # Stage 2 chained in VMEM: intermediate activation never touches HBM.
    y = jnp.dot(h.astype(MXU_DTYPE), w2_ref[...],
                preferred_element_type=jnp.float32)
    y = (y + b2_ref[...]) * scale_ref[1]
    o_ref[...] = y.astype(o_ref.dtype)


def _round_up(x, m):
    return (x + m - 1) // m * m


def _choose_tm(M, tm_max=1024, min_grid=4):
    """Row-tile size.

    Prefer the largest tm that (a) divides M (no jnp.pad / no out[:M] copy),
    (b) is a multiple of 16 (bf16 MXU feed), (c) keeps the grid >= min_grid so
    v7x's 2 TensorCores each get >= 2 pipelined steps, capped at tm_max.
    """
    cap = min(tm_max, M)
    best = 0
    for tm in range(16, cap + 1, 16):
        if M % tm == 0 and M // tm >= min_grid:
            best = tm
    if best:
        return best, M
    for tm in range(16, cap + 1, 16):          # relax the grid constraint
        if M % tm == 0:
            best = tm
    if best:
        return best, M
    # Ragged M fallback: 8-aligned tile + padding (one extra HBM pass).
    # TODO(synk): replace with a pl.when-guarded masked store on the last tile.
    tm = max(8, min(tm_max, _round_up(M, 8)))
    return tm, _round_up(M, tm)


def subpolicy_pair_apply(embed, w1, b1, w2, b2, idx1, idx2, scale1, scale2,
                         *, tm_max=1024):
    """Fused two-stage apply.

    embed: (B,S,H) f32; w*: (num_ops,H,H) bf16; b*: (num_ops,1,H) f32;
    idx*: scalar int; scale*: scalar f32 (== sum(sampled_op) per stage).
    """
    B, S, H = embed.shape
    M = B * S
    out_dtype = embed.dtype

    # Parameter stacks should already be stored in the feed dtypes at init
    # time; cast only if the caller did not (no-op in the expected path).
    if w1.dtype != MXU_DTYPE:
        w1 = w1.astype(MXU_DTYPE)
    if w2.dtype != MXU_DTYPE:
        w2 = w2.astype(MXU_DTYPE)
    if b1.dtype != jnp.float32:
        b1 = b1.astype(jnp.float32)
    if b2.dtype != jnp.float32:
        b2 = b2.astype(jnp.float32)

    x = embed.reshape(M, H)                       # f32 straight in, cast in-kernel
    tm, Mp = _choose_tm(M, tm_max=tm_max)
    if Mp != M:
        x = jnp.pad(x, ((0, Mp - M), (0, 0)))
    grid = (Mp // tm,)

    idx = jnp.stack([jnp.asarray(idx1, jnp.int32),
                     jnp.asarray(idx2, jnp.int32)])
    scale = jnp.stack([jnp.asarray(scale1, jnp.float32),
                       jnp.asarray(scale2, jnp.float32)])

    x_b = jnp.dtype(embed.dtype).itemsize
    o_b = jnp.dtype(out_dtype).itemsize
    w_b = jnp.dtype(MXU_DTYPE).itemsize
    # Double-buffered x/out tiles + (double-buffered) resident W/b slices +
    # in-kernel f32/bf16 temporaries; x2 headroom, well under v7x's 64 MiB.
    tile_bytes = (2 * tm * H * (x_b + o_b) + 2 * 2 * H * H * w_b
                  + 4 * H * 4 + 3 * tm * H * 4)
    vmem_limit = int(min(48 << 20, max(16 << 20, 2 * tile_bytes)))

    grid_spec = pltpu.PrefetchScalarGridSpec(
        num_scalar_prefetch=2,                    # idx (drives W/b maps), scale
        grid=grid,
        in_specs=[
            pl.BlockSpec((tm, H), lambda i, idx_ref, sc_ref: (i, 0)),
            pl.BlockSpec((pl.Squeezed(), H, H),
                         lambda i, idx_ref, sc_ref: (idx_ref[0], 0, 0)),
            pl.BlockSpec((pl.Squeezed(), 1, H),
                         lambda i, idx_ref, sc_ref: (idx_ref[0], 0, 0)),
            pl.BlockSpec((pl.Squeezed(), H, H),
                         lambda i, idx_ref, sc_ref: (idx_ref[1], 0, 0)),
            pl.BlockSpec((pl.Squeezed(), 1, H),
                         lambda i, idx_ref, sc_ref: (idx_ref[1], 0, 0)),
        ],
        out_specs=pl.BlockSpec((tm, H), lambda i, idx_ref, sc_ref: (i, 0)),
    )
    out = pl.pallas_call(
        _fused_subpolicy_kernel,
        grid_spec=grid_spec,
        out_shape=jax.ShapeDtypeStruct((Mp, H), out_dtype),
        compiler_params=pltpu.CompilerParams(
            dimension_semantics=("parallel",),    # row tiles split across TCs on v7x
            vmem_limit_bytes=vmem_limit),
        cost_estimate=pl.CostEstimate(
            flops=2 * 2 * Mp * H * H,
            transcendentals=0,
            bytes_accessed=(Mp * H * x_b + Mp * H * o_b
                            + 2 * H * H * w_b + 2 * H * 4)),
    )(idx, scale, x, w1, b1, w2, b2)
    if Mp != M:
        out = out[:M]
    return out.reshape(B, S, H)


# ----------------------------------------------------------------------------
# JAX glue reproducing the module's training-branch control flow
# ----------------------------------------------------------------------------
def gumbel_softmax_hard(key, logits, tau):
    """F.gumbel_softmax(..., hard=True) forward value."""
    u = jax.random.uniform(key, logits.shape, minval=1e-6, maxval=1.0 - 1e-6)
    g = -jnp.log(-jnp.log(u))
    y_soft = jax.nn.softmax((logits + g) / tau)
    idx = jnp.argmax(y_soft)
    y_hard = jax.nn.one_hot(idx, logits.shape[0], dtype=logits.dtype)
    return y_hard + y_soft - jax.lax.stop_gradient(y_soft), idx


def subpolicy_stage_sample(key, weights, temperature, num_ops):
    """Per-stage sampling: (sampled_idx, op_scale)."""
    k_g, k_rand = jax.random.split(key)
    sampled_op, _ = gumbel_softmax_hard(k_g, weights, temperature)
    # weights initialized to ones -> mean == 1 -> torch.randint branch.
    # TODO(synk): host-side torch/python RNG not reproducible bit-exactly;
    # jax.random is the deterministic stand-in.
    sampled_idx = jax.random.randint(k_rand, (), 0, num_ops)
    # (embeds.unsqueeze(0) * sampled_op.view(-1,1,1,1)).sum(0)
    #   == embeds * sum(sampled_op) on the single-op branch.
    op_scale = jnp.sum(sampled_op)                # == 1.0 for hard one-hot
    return sampled_idx, op_scale


def policy_gumbel_forward(key, inputs, embed, stage_params, stage_weights,
                          temperature, num_sub_policies):
    """Policy_gumbel forward, num_chunks == 1 path (the chunked branch in the
    source references an undefined `indices` and cannot execute)."""
    # TODO(synk): num_chunks > 1 branch of Policy_gumbel.forward is not
    # translatable (uses undefined `indices` / wrong _forward arity in source).
    k_sp, key = jax.random.split(key)
    sub_policy_index = jax.random.randint(k_sp, (), 0, num_sub_policies)
    # All sub-policies are deepcopies with identical ones-initialized params,
    # so the selected index only affects bookkeeping, not values.
    assert len(stage_params) == 2, "fused kernel covers operation_count == 2"
    samples = []
    for (w_stack, _), weights in zip(stage_params, stage_weights):
        key, k_stage = jax.random.split(key)
        samples.append(subpolicy_stage_sample(k_stage, weights, temperature,
                                              w_stack.shape[0]))
    (idx1, s1), (idx2, s2) = samples
    (w1, b1), (w2, b2) = stage_params
    out_embed = subpolicy_pair_apply(embed, w1, b1, w2, b2,
                                     idx1, idx2, s1, s2)
    return inputs, out_embed, sub_policy_index, samples


# ----------------------------------------------------------------------------
# Demo + correctness check
# ----------------------------------------------------------------------------
def _fused_ref(embed, stage_params, samples):
    """Pure-JAX reference of the fused path with the same bf16 MXU feeds."""
    B, S, H = embed.shape
    x = embed.reshape(-1, H).astype(jnp.float32)
    for (w, b), (idx, scale) in zip(stage_params, samples):
        y = jnp.dot(x.astype(MXU_DTYPE), w[idx].astype(MXU_DTYPE),
                    preferred_element_type=jnp.float32)
        x = (y + b[idx].astype(jnp.float32)) * scale
    return x.reshape(B, S, H).astype(embed.dtype)


if __name__ == "__main__":
    B, S, H = 4, 256, 128      # M = 1024 -> tm = 256, grid = 4 (even; both v7x TCs busy)
    key = jax.random.PRNGKey(0)
    k_embed, k_in, k_w1, k_b1, k_w2, k_b2, k_fwd = jax.random.split(key, 7)

    embed = jax.random.normal(k_embed, (B, S, H), jnp.float32)
    inputs = jax.random.randint(k_in, (B, S), 0, 1000)     # token ids, pass-through

    # Synthetic deterministic affine "operations"; W stored in bf16 (MXU feed
    # dtype) and b in f32 ONCE at init -> no per-call stack-wide casts.
    w_stack1 = (jnp.eye(H, dtype=jnp.float32)[None] +
                0.05 * jax.random.normal(k_w1, (NUM_OPS_STAGE1, H, H), jnp.float32)
                ).astype(MXU_DTYPE)
    b_stack1 = 0.01 * jax.random.normal(k_b1, (NUM_OPS_STAGE1, 1, H), jnp.float32)
    w_stack2 = (jnp.eye(H, dtype=jnp.float32)[None] +
                0.05 * jax.random.normal(k_w2, (NUM_OPS_STAGE2, H, H), jnp.float32)
                ).astype(MXU_DTYPE)
    b_stack2 = 0.01 * jax.random.normal(k_b2, (NUM_OPS_STAGE2, 1, H), jnp.float32)

    stage_params = [(w_stack1, b_stack1), (w_stack2, b_stack2)][:OPERATION_COUNT]
    stage_weights = [jnp.ones((NUM_OPS_STAGE1,), jnp.float32),
                     jnp.ones((NUM_OPS_STAGE2,), jnp.float32)][:OPERATION_COUNT]

    out_inputs, out_embed, sub_policy_index, samples = policy_gumbel_forward(
        k_fwd, inputs, embed, stage_params, stage_weights,
        TEMPERATURE, NUM_SUB_POLICIES)
    jax.block_until_ready(out_embed)

    # Pure-JAX reference of the fused kernel path (same bf16 MXU feeds).
    ref_embed = _fused_ref(embed, stage_params, samples)

    assert out_embed.shape == embed.shape and out_embed.dtype == embed.dtype
    assert jnp.allclose(out_embed, ref_embed, atol=2e-2, rtol=2e-2), "kernel mismatch"
    assert out_inputs.shape == inputs.shape
    assert int(sub_policy_index) >= 0

    print("KERNEL_OK")
</pallas_src>

<mosaic_0001>
module attributes {stable_mosaic.version = 11 : i64} {
  func.func @_fused_subpolicy_kernel(%arg0: i32, %arg1: memref<2xi32, #tpu.memory_space<smem>>, %arg2: memref<2xf32, #tpu.memory_space<smem>>, %arg3: memref<256x128xf32, #tpu.memory_space<vmem>>, %arg4: memref<1x128x128xbf16, #tpu.memory_space<vmem>>, %arg5: memref<1x1x128xf32, #tpu.memory_space<vmem>>, %arg6: memref<1x128x128xbf16, #tpu.memory_space<vmem>>, %arg7: memref<1x1x128xf32, #tpu.memory_space<vmem>>, %arg8: memref<256x128xf32, #tpu.memory_space<vmem>>) attributes {dimension_semantics = [#tpu.dimension_semantics<parallel>], iteration_bounds = array<i64: 4>, scalar_prefetch = 2 : i64, scratch_operands = 0 : i64, tpu.core_type = #tpu.core_type<tc>, window_params = [{transform_indices = @transform_0, window_bounds = array<i64: 256, 128>}, {transform_indices = @transform_1, window_bounds = array<i64: 1, 128, 128>}, {transform_indices = @transform_2, window_bounds = array<i64: 1, 1, 128>}, {transform_indices = @transform_3, window_bounds = array<i64: 1, 128, 128>}, {transform_indices = @transform_4, window_bounds = array<i64: 1, 1, 128>}, {transform_indices = @transform_5, window_bounds = array<i64: 256, 128>}]} {
    %c0 = arith.constant 0 : index
    %c0_0 = arith.constant 0 : index
    %0 = vector.load %arg3[%c0, %c0_0] : memref<256x128xf32, #tpu.memory_space<vmem>>, vector<256x128xf32>
    %1 = arith.truncf %0 : vector<256x128xf32> to vector<256x128xbf16>
    %c0_1 = arith.constant 0 : index
    %c0_2 = arith.constant 0 : index
    %c0_3 = arith.constant 0 : index
    %2 = vector.load %arg4[%c0_1, %c0_2, %c0_3] : memref<1x128x128xbf16, #tpu.memory_space<vmem>>, vector<1x128x128xbf16>
    %3 = vector.shape_cast %2 : vector<1x128x128xbf16> to vector<128x128xbf16>
    %cst = arith.constant dense<0.000000e+00> : vector<256x128xf32>
    %4 = tpu.matmul %1, %3, %cst {dimension_numbers = #tpu.dot_dimension_numbers<[1], [0], [0], [1], [0, 0, 1, 1], [], []>} : vector<256x128xbf16>, vector<128x128xbf16>, vector<256x128xf32> -> vector<256x128xf32>
    %c0_4 = arith.constant 0 : index
    %c0_5 = arith.constant 0 : index
    %c0_6 = arith.constant 0 : index
    %5 = vector.load %arg5[%c0_4, %c0_5, %c0_6] : memref<1x1x128xf32, #tpu.memory_space<vmem>>, vector<1x1x128xf32>
    %6 = vector.shape_cast %5 : vector<1x1x128xf32> to vector<1x128xf32>
    %7 = vector.broadcast %6 : vector<1x128xf32> to vector<256x128xf32>
    %8 = arith.addf %4, %7 : vector<256x128xf32>
    %c0_7 = arith.constant 0 : index
    %9 = memref.load %arg2[%c0_7] : memref<2xf32, #tpu.memory_space<smem>>
    %10 = vector.broadcast %9 : f32 to vector<256x128xf32>
    %11 = arith.mulf %8, %10 : vector<256x128xf32>
    %12 = arith.truncf %11 : vector<256x128xf32> to vector<256x128xbf16>
    %c0_8 = arith.constant 0 : index
    %c0_9 = arith.constant 0 : index
    %c0_10 = arith.constant 0 : index
    %13 = vector.load %arg6[%c0_8, %c0_9, %c0_10] : memref<1x128x128xbf16, #tpu.memory_space<vmem>>, vector<1x128x128xbf16>
    %14 = vector.shape_cast %13 : vector<1x128x128xbf16> to vector<128x128xbf16>
    %cst_11 = arith.constant dense<0.000000e+00> : vector<256x128xf32>
    %15 = tpu.matmul %12, %14, %cst_11 {dimension_numbers = #tpu.dot_dimension_numbers<[1], [0], [0], [1], [0, 0, 1, 1], [], []>} : vector<256x128xbf16>, vector<128x128xbf16>, vector<256x128xf32> -> vector<256x128xf32>
    %c0_12 = arith.constant 0 : index
    %c0_13 = arith.constant 0 : index
    %c0_14 = arith.constant 0 : index
    %16 = vector.load %arg7[%c0_12, %c0_13, %c0_14] : memref<1x1x128xf32, #tpu.memory_space<vmem>>, vector<1x1x128xf32>
    %17 = vector.shape_cast %16 : vector<1x1x128xf32> to vector<1x128xf32>
    %18 = vector.broadcast %17 : vector<1x128xf32> to vector<256x128xf32>
    %19 = arith.addf %15, %18 : vector<256x128xf32>
    %c1 = arith.constant 1 : index
    %20 = memref.load %arg2[%c1] : memref<2xf32, #tpu.memory_space<smem>>
    %21 = vector.broadcast %20 : f32 to vector<256x128xf32>
    %22 = arith.mulf %19, %21 : vector<256x128xf32>
    %c0_15 = arith.constant 0 : index
    %c0_16 = arith.constant 0 : index
    %23 = vector.load %arg8[%c0_15, %c0_16] : memref<256x128xf32, #tpu.memory_space<vmem>>, vector<256x128xf32>
    tpu.vector_store %arg8[%c0_15, %c0_16], %22 {strides = array<i32>} : memref<256x128xf32, #tpu.memory_space<vmem>>, vector<256x128xf32>,
    return
  }
  func.func @transform_0(%arg0: i32, %arg1: memref<2xi32, #tpu.memory_space<smem>>, %arg2: memref<2xf32, #tpu.memory_space<smem>>) -> (i32, i32) {
    %c0_i32 = arith.constant 0 : i32
    %c0_i32_0 = arith.constant 0 : i32
    return %arg0, %c0_i32 : i32, i32
  }
  func.func @transform_1(%arg0: i32, %arg1: memref<2xi32, #tpu.memory_space<smem>>, %arg2: memref<2xf32, #tpu.memory_space<smem>>) -> (i32, i32, i32) {
    %c0 = arith.constant 0 : index
    %0 = memref.load %arg1[%c0] : memref<2xi32, #tpu.memory_space<smem>>
    %c0_i32 = arith.constant 0 : i32
    %c0_i32_0 = arith.constant 0 : i32
    %c0_i32_1 = arith.constant 0 : i32
    return %0, %c0_i32, %c0_i32_0 : i32, i32, i32
  }
  func.func @transform_2(%arg0: i32, %arg1: memref<2xi32, #tpu.memory_space<smem>>, %arg2: memref<2xf32, #tpu.memory_space<smem>>) -> (i32, i32, i32) {
    %c0 = arith.constant 0 : index
    %0 = memref.load %arg1[%c0] : memref<2xi32, #tpu.memory_space<smem>>
    %c0_i32 = arith.constant 0 : i32
    %c0_i32_0 = arith.constant 0 : i32
    %c0_i32_1 = arith.constant 0 : i32
    return %0, %c0_i32, %c0_i32_0 : i32, i32, i32
  }
  func.func @transform_3(%arg0: i32, %arg1: memref<2xi32, #tpu.memory_space<smem>>, %arg2: memref<2xf32, #tpu.memory_space<smem>>) -> (i32, i32, i32) {
    %c1 = arith.constant 1 : index
    %0 = memref.load %arg1[%c1] : memref<2xi32, #tpu.memory_space<smem>>
    %c0_i32 = arith.constant 0 : i32
    %c0_i32_0 = arith.constant 0 : i32
    %c0_i32_1 = arith.constant 0 : i32
    return %0, %c0_i32, %c0_i32_0 : i32, i32, i32
  }
  func.func @transform_4(%arg0: i32, %arg1: memref<2xi32, #tpu.memory_space<smem>>, %arg2: memref<2xf32, #tpu.memory_space<smem>>) -> (i32, i32, i32) {
    %c1 = arith.constant 1 : index
    %0 = memref.load %arg1[%c1] : memref<2xi32, #tpu.memory_space<smem>>
    %c0_i32 = arith.constant 0 : i32
    %c0_i32_0 = arith.constant 0 : i32
    %c0_i32_1 = arith.constant 0 : i32
    return %0, %c0_i32, %c0_i32_0 : i32, i32, i32
  }
  func.func @transform_5(%arg0: i32, %arg1: memref<2xi32, #tpu.memory_space<smem>>, %arg2: memref<2xf32, #tpu.memory_space<smem>>) -> (i32, i32) {
    %c0_i32 = arith.constant 0 : i32
    %c0_i32_0 = arith.constant 0 : i32
    return %arg0, %c0_i32 : i32, i32
  }
}

</mosaic_0001>

<llo_original>
// kernel: tpu_custom_call.1
$region0: #{tpu_custom_call.1}
  #allocation0 [shape = 'u32[]', space=smem, size = 0x4, offset = 0x4, fixed_abs, tag = 'smem constant byte address 0x4 - core index']
  #allocation1 [shape = 'u32[144,128]{1,0:T(1,128)}', space=vmem, size = 0x12000, scoped, tag = 'internal scratch']
  #allocation2 [shape = 's32[1]{0}', space=sflag, size = 0x4, scoped, tag = 'scoped memory for tpu_custom_call.1']
  #allocation3 [shape = 'u8[512]{0}', space=smem, size = 0x200, scoped, tag = 'prefetched SMEM operand 0']
  #allocation4 [shape = 'u8[512]{0}', space=smem, size = 0x200, scoped, tag = 'prefetched SMEM operand 1']
  %s0 = inlined_call_operand.hbm [shape: s32[2], index: 0, kind: input, shape index: {}]
  %s1 = inlined_call_operand.vmem [shape: f32[2], index: 1, kind: input, shape index: {}]
  %s2 = inlined_call_operand.hbm [shape: f32[1024,128], index: 2, kind: input, shape index: {}]
  %s3 = inlined_call_operand.hbm [shape: bf16[6,128,128], index: 3, kind: input, shape index: {}]
  %s4 = inlined_call_operand.vmem [shape: f32[6,1,128], index: 4, kind: input, shape index: {}]
  %s5 = inlined_call_operand.hbm [shape: bf16[3,128,128], index: 5, kind: input, shape index: {}]
  %s6 = inlined_call_operand.vmem [shape: f32[3,1,128], index: 6, kind: input, shape index: {}]
  %s7 = inlined_call_operand.hbm [shape: f32[1024,128], index: 7, kind: output, shape index: {}]
  %s8 = sld [smem:[#allocation0]]
  $region65: #{tpu_custom_call.1} parent=0
    _
  %s10 = ssub.s32 1, %s8
  %s11 = scalar_select 0, %s10, %s8
  %13 = dma.hbm_to_smem %s0, 16, [#allocation3], [#allocation2]
  %s14 = sshll.u32 %s1, 4
  %s15 = int_to_ptr.vmem [resolvable:$true] %s14
  %17 = dma.vmem_to_smem %s15, 16, [#allocation4], [#allocation2]
  %18 = dma.done [#allocation2], 32
  %19 = sfence
  $region1: #{tpu_custom_call.1} parent=0
    #allocation5 [shape = 'u8[262144]{0}', space=vmem, size = 0x40000, scoped, tag = 'input window, operand 2']
    #allocation6 [shape = 's32[2]{0}', space=sflag, size = 0x8, scoped, tag = 'scoped memory for tpu_custom_call.1']
    #allocation7 [shape = 's32[2]{0}', space=sflag, size = 0x8, scoped, tag = 'scoped memory for tpu_custom_call.1']
    #allocation8 [shape = 'u8[32768]{0}', space=vmem, size = 0x8000, scoped, tag = 'input window, operand 3, single buffered']
    #allocation9 [shape = 's32[1]{0}', space=sflag, size = 0x4, scoped, tag = 'scoped memory for tpu_custom_call.1']
    #allocation10 [shape = 'u8[32768]{0}', space=vmem, size = 0x8000, scoped, tag = 'input window, operand 5, single buffered']
    #allocation11 [shape = 'u8[262144]{0}', space=vmem, size = 0x40000, scoped, tag = 'output window, operand 0']
    %20 = vsyncpa [#allocation6], 0
    %s21 = scalar_lea.sflag [#allocation6], 1
    %22 = vsyncpa %s21, 0
    %23 = vsyncpa [#allocation9], 0
    %24 = vsyncpa [#allocation7], 0
    %s25 = scalar_lea.sflag [#allocation7], 1
    %26 = vsyncpa %s25, 0
    loop: start=0, step=1, limit=6
    $region2: #{tpu_custom_call.1} parent=1 // loop_pre_header
      _
    $region3: #{tpu_custom_call.1} parent=1 // loop_header
      %s28 = sphi 0, %s32
      %p29 = scmp.ge.s32.totalorder %s28, 6
      %s38 = sphi 0, %s40
      %s41 = sphi 0, %s38
      %s42 = sphi 0, %s41
      %s58 = sphi 0, %s42
      %s66 = sphi 0, %s68
      %s69 = sphi 0, %s66
      %s70 = sphi 0, %s69
      %s86 = sphi 0, %s70
      %s94 = sphi 0, %s96
      %s97 = sphi 0, %s94
      %s98 = sphi 0, %s97
      %s114 = sphi 0, %s98
      %s122 = sphi 0, %s124
      %s125 = sphi 0, %s122
      %s126 = sphi 0, %s125
      %s142 = sphi 0, %s126
      %s150 = sphi 0, %s152
      %s153 = sphi 0, %s150
      %s154 = sphi 0, %s153
      %s170 = sphi 0, %s154
      %s176 = sphi 0, %s178
      %s179 = sphi 0, %s176
      %s180 = sphi 0, %s179
      %s196 = sphi 0, %s180
    $region4: #{tpu_custom_call.1} parent=1 // loop_header_branch
      %31 = sbr.rel (%p29) target = $region8
    $region5: #{tpu_custom_call.1} parent=1 // loop_body
      %s33 = ssub.s32 %s28, 1
      %s34 = ssub.s32 %s28, 2
      %s35 = sadd.s32 %s28, 1
      %s36 = ssub.s32 %s28, %s35
      %p37 = scmp.eq.s32.totalorder %s36, 0
      %s39 = sadd.s32 %s38, 1
      %s40 = scalar_select %p37, %s38, %s39
      %p43 = pneg %p37
      %p44 = scmp.eq.s32.totalorder %s28, 3
      %p45 = por %p43, %p44
      %p46 = scmp.ne.s32.totalorder %s38, %s41
      %p47 = scmp.eq.s32.totalorder %s28, 0
      %p48 = por %p46, %p47
      %p49 = scmp.ne.s32.totalorder %s38, %s41
      %p50 = scmp.eq.s32.totalorder %s33, 3
      %p51 = por %p49, %p50
      %p52 = scmp.ne.s32.totalorder %s41, %s42
      %p53 = scmp.eq.s32.totalorder %s33, 0
      %p54 = por %p52, %p53
      %p55 = scmp.ne.s32.totalorder %s41, %s42
      %p56 = scmp.eq.s32.totalorder %s34, 3
      %p57 = por %p55, %p56
      %p59 = scmp.ne.s32.totalorder %s42, %s58
      %p60 = scmp.eq.s32.totalorder %s34, 0
      %p61 = por %p59, %p60
      %s62 = sld [smem:[#allocation3]]
      %s63 = sld [smem:[#allocation3]]
      %s64 = ssub.s32 %s62, %s63
      %p65 = scmp.eq.s32.totalorder %s64, 0
      %s67 = sadd.s32 %s66, 1
      %s68 = scalar_select %p65, %s66, %s67
      %p71 = pneg %p65
      %p72 = scmp.eq.s32.totalorder %s28, 3
      %p73 = por %p71, %p72
      %p74 = scmp.ne.s32.totalorder %s66, %s69
      %p75 = scmp.eq.s32.totalorder %s28, 0
      %p76 = por %p74, %p75
      %p77 = scmp.ne.s32.totalorder %s66, %s69
      %p78 = scmp.eq.s32.totalorder %s33, 3
      %p79 = por %p77, %p78
      %p80 = scmp.ne.s32.totalorder %s69, %s70
      %p81 = scmp.eq.s32.totalorder %s33, 0
      %p82 = por %p80, %p81
      %p83 = scmp.ne.s32.totalorder %s69, %s70
      %p84 = scmp.eq.s32.totalorder %s34, 3
      %p85 = por %p83, %p84
      %p87 = scmp.ne.s32.totalorder %s70, %s86
      %p88 = scmp.eq.s32.totalorder %s34, 0
      %p89 = por %p87, %p88
      %s90 = sld [smem:[#allocation3]]
      %s91 = sld [smem:[#allocation3]]
      %s92 = ssub.s32 %s90, %s91
      %p93 = scmp.eq.s32.totalorder %s92, 0
      %s95 = sadd.s32 %s94, 1
      %s96 = scalar_select %p93, %s94, %s95
      %p99 = pneg %p93
      %p100 = scmp.eq.s32.totalorder %s28, 3
      %p101 = por %p99, %p100
      %p102 = scmp.ne.s32.totalorder %s94, %s97
      %p103 = scmp.eq.s32.totalorder %s28, 0
      %p104 = por %p102, %p103
      %p105 = scmp.ne.s32.totalorder %s94, %s97
      %p106 = scmp.eq.s32.totalorder %s33, 3
      %p107 = por %p105, %p106
      %p108 = scmp.ne.s32.totalorder %s97, %s98
      %p109 = scmp.eq.s32.totalorder %s33, 0
      %p110 = por %p108, %p109
      %p111 = scmp.ne.s32.totalorder %s97, %s98
      %p112 = scmp.eq.s32.totalorder %s34, 3
      %p113 = por %p111, %p112
      %p115 = scmp.ne.s32.totalorder %s98, %s114
      %p116 = scmp.eq.s32.totalorder %s34, 0
      %p117 = por %p115, %p116
      %s118 = sld [smem:[#allocation3 + $0x1]]
      %s119 = sld [smem:[#allocation3 + $0x1]]
      %s120 = ssub.s32 %s118, %s119
      %p121 = scmp.eq.s32.totalorder %s120, 0
      %s123 = sadd.s32 %s122, 1
      %s124 = scalar_select %p121, %s122, %s123
      %p127 = pneg %p121
      %p128 = scmp.eq.s32.totalorder %s28, 3
      %p129 = por %p127, %p128
      %p130 = scmp.ne.s32.totalorder %s122, %s125
      %p131 = scmp.eq.s32.totalorder %s28, 0
      %p132 = por %p130, %p131
      %p133 = scmp.ne.s32.totalorder %s122, %s125
      %p134 = scmp.eq.s32.totalorder %s33, 3
      %p135 = por %p133, %p134
      %p136 = scmp.ne.s32.totalorder %s125, %s126
      %p137 = scmp.eq.s32.totalorder %s33, 0
      %p138 = por %p136, %p137
      %p139 = scmp.ne.s32.totalorder %s125, %s126
      %p140 = scmp.eq.s32.totalorder %s34, 3
      %p141 = por %p139, %p140
      %p143 = scmp.ne.s32.totalorder %s126, %s142
      %p144 = scmp.eq.s32.totalorder %s34, 0
      %p145 = por %p143, %p144
      %s146 = sld [smem:[#allocation3 + $0x1]]
      %s147 = sld [smem:[#allocation3 + $0x1]]
      %s148 = ssub.s32 %s146, %s147
      %p149 = scmp.eq.s32.totalorder %s148, 0
      %s151 = sadd.s32 %s150, 1
      %s152 = scalar_select %p149, %s150, %s151
      %p155 = pneg %p149
      %p156 = scmp.eq.s32.totalorder %s28, 3
      %p157 = por %p155, %p156
      %p158 = scmp.ne.s32.totalorder %s150, %s153
      %p159 = scmp.eq.s32.totalorder %s28, 0
      %p160 = por %p158, %p159
      %p161 = scmp.ne.s32.totalorder %s150, %s153
      %p162 = scmp.eq.s32.totalorder %s33, 3
      %p163 = por %p161, %p162
      %p164 = scmp.ne.s32.totalorder %s153, %s154
      %p165 = scmp.eq.s32.totalorder %s33, 0
      %p166 = por %p164, %p165
      %p167 = scmp.ne.s32.totalorder %s153, %s154
      %p168 = scmp.eq.s32.totalorder %s34, 3
      %p169 = por %p167, %p168
      %p171 = scmp.ne.s32.totalorder %s154, %s170
      %p172 = scmp.eq.s32.totalorder %s34, 0
      %p173 = por %p171, %p172
      %s174 = ssub.s32 %s28, %s35
      %p175 = scmp.eq.s32.totalorder %s174, 0
      %s177 = sadd.s32 %s176, 1
      %s178 = scalar_select %p175, %s176, %s177
      %p181 = pneg %p175
      %p182 = scmp.eq.s32.totalorder %s28, 3
      %p183 = por %p181, %p182
      %p184 = scmp.ne.s32.totalorder %s176, %s179
      %p185 = scmp.eq.s32.totalorder %s28, 0
      %p186 = por %p184, %p185
      %p187 = scmp.ne.s32.totalorder %s176, %s179
      %p188 = scmp.eq.s32.totalorder %s33, 3
      %p189 = por %p187, %p188
      %p190 = scmp.ne.s32.totalorder %s179, %s180
      %p191 = scmp.eq.s32.totalorder %s33, 0
      %p192 = por %p190, %p191
      %p193 = scmp.ne.s32.totalorder %s179, %s180
      %p194 = scmp.eq.s32.totalorder %s34, 3
      %p195 = por %p193, %p194
      %p197 = scmp.ne.s32.totalorder %s180, %s196
      %p198 = scmp.eq.s32.totalorder %s34, 0
      %p199 = por %p197, %p198
      %p200 = scmp.le.s32.totalorder 1, %s28
      %p201 = scmp.lt.s32.totalorder %s28, 5
      %p202 = pnand %p200, %p201
      %p203 = pneg %p202
      // Predicated region
      $region9: #{tpu_custom_call.1} parent=5 // pred_check
        _
      $region10: #{tpu_custom_call.1} parent=5 // pred_check_branch
        %205 = sbr.rel (%p202) target = $region12
      $region11: #{tpu_custom_call.1} parent=5 // pred_region
        %s206 = ssub.s32 %s28, 1
        // Predicated region
        $region13: #{tpu_custom_call.1} parent=11 // pred_check
          %p207 = pneg %p82
        $region14: #{tpu_custom_call.1} parent=11 // pred_check_branch
          %209 = sbr.rel (%p207) target = $region16
        $region15: #{tpu_custom_call.1} parent=11 // pred_region
          %s210 = sld [smem:[#allocation3]]
          %s212 = ssub.s32 1024, 1024
          %213 = vsyncadd [#allocation9], %s212
          %s214 = smul.addr %s210, 16
          %s215 = smul.addr %s214, 64
          %s216 = scalar_lea.hbm %s3, %s215
          %s217 = sshll.u32 [#allocation8], 4
          %s218 = int_to_ptr.vmem [resolvable:$true] %s217
          %223 = dma.hbm_to_vmem [thread:$0]  %s216, 1024, %s218, [#allocation9], 64, 64, 4
        $region16: #{tpu_custom_call.1} parent=11 // pred_fallthru
          _
        // Predicated region
        $region17: #{tpu_custom_call.1} parent=11 // pred_check
          %p224 = pneg %p110
        $region18: #{tpu_custom_call.1} parent=11 // pred_check_branch
          %226 = sbr.rel (%p224) target = $region20
        $region19: #{tpu_custom_call.1} parent=11 // pred_region
          %s227 = sld [smem:[#allocation3]]
          %p228 = scmp.lt.s32.totalorder %s227, 5
          %s229 = scalar_select %p228, %s227, 5
          %s230 = scalar_lea.vmem %s4, %s229
          %s231 = sld [smem:[#allocation3]]
        $region20: #{tpu_custom_call.1} parent=11 // pred_fallthru
          _
        // Predicated region
        $region21: #{tpu_custom_call.1} parent=11 // pred_check
          %p232 = pneg %p138
        $region22: #{tpu_custom_call.1} parent=11 // pred_check_branch
          %234 = sbr.rel (%p232) target = $region24
        $region23: #{tpu_custom_call.1} parent=11 // pred_region
          %s235 = sld [smem:[#allocation3 + $0x1]]
          %s237 = ssub.s32 1024, 1024
          %238 = vsyncadd [#allocation9], %s237
          %s239 = smul.addr %s235, 16
          %s240 = smul.addr %s239, 64
          %s241 = scalar_lea.hbm %s5, %s240
          %s242 = sshll.u32 [#allocation10], 4
          %s243 = int_to_ptr.vmem [resolvable:$true] %s242
          %248 = dma.hbm_to_vmem [thread:$0]  %s241, 1024, %s243, [#allocation9], 64, 64, 4
        $region24: #{tpu_custom_call.1} parent=11 // pred_fallthru
          _
        // Predicated region
        $region25: #{tpu_custom_call.1} parent=11 // pred_check
          %p249 = pneg %p166
        $region26: #{tpu_custom_call.1} parent=11 // pred_check_branch
          %251 = sbr.rel (%p249) target = $region28
        $region27: #{tpu_custom_call.1} parent=11 // pred_region
          %s252 = sld [smem:[#allocation3 + $0x1]]
          %p253 = scmp.lt.s32.totalorder %s252, 2
          %s254 = scalar_select %p253, %s252, 2
          %s255 = scalar_lea.vmem %s6, %s254
          %s256 = sld [smem:[#allocation3 + $0x1]]
        $region28: #{tpu_custom_call.1} parent=11 // pred_fallthru
          _
      $region12: #{tpu_custom_call.1} parent=5 // pred_fallthru
        _
      %p257 = scmp.lt.s32.totalorder %s28, 4
      // Predicated region
      $region29: #{tpu_custom_call.1} parent=5 // pred_check
        %p258 = pneg %p257
      $region30: #{tpu_custom_call.1} parent=5 // pred_check_branch
        %260 = sbr.rel (%p258) target = $region32
      $region31: #{tpu_custom_call.1} parent=5 // pred_region
        // Predicated region
        $region33: #{tpu_custom_call.1} parent=31 // pred_check
          %p261 = pneg %p48
        $region34: #{tpu_custom_call.1} parent=31 // pred_check_branch
          %263 = sbr.rel (%p261) target = $region36
        $region35: #{tpu_custom_call.1} parent=31 // pred_region
          %s264 = sand.u32 %s38, 1
          %s265 = scalar_lea.sflag [#allocation6], %s264
          %s266 = sand.u32 %s38, 1
          %s267 = smul.addr %s266, 256
          %s268 = scalar_lea.vmem [#allocation5], %s267
          %s269 = smul.u32 32, %s28
          %s271 = ssub.s32 4096, 4096
          %272 = vsyncadd %s265, %s271
          %s273 = smul.addr %s269, 128
          %s274 = scalar_lea.hbm %s2, %s273
          %s275 = sshll.u32 %s268, 4
          %s276 = int_to_ptr.vmem [resolvable:$true] %s275
          %281 = dma.hbm_to_vmem [thread:$0]  %s274, 4096, %s276, %s265, 128, 128, 8
        $region36: #{tpu_custom_call.1} parent=31 // pred_fallthru
          _
      $region32: #{tpu_custom_call.1} parent=5 // pred_fallthru
        _
      %p282 = scmp.le.s32.totalorder 1, %s28
      %p283 = scmp.lt.s32.totalorder %s28, 5
      %p284 = pnand %p282, %p283
      %p285 = pneg %p284
      // Predicated region
      $region37: #{tpu_custom_call.1} parent=5 // pred_check
        _
      $region38: #{tpu_custom_call.1} parent=5 // pred_check_branch
        %287 = sbr.rel (%p284) target = $region40
      $region39: #{tpu_custom_call.1} parent=5 // pred_region
        %s288 = ssub.s32 %s28, 1
        %s289 = sand.u32 %s41, 1
        %s290 = scalar_lea.sflag [#allocation6], %s289
        %s291 = sand.u32 %s41, 1
        %s292 = smul.addr %s291, 256
        %s293 = scalar_lea.vmem [#allocation5], %s292
        // Predicated region
        $region41: #{tpu_custom_call.1} parent=39 // pred_check
          %p294 = pneg %p54
        $region42: #{tpu_custom_call.1} parent=39 // pred_check_branch
          %296 = sbr.rel (%p294) target = $region44
        $region43: #{tpu_custom_call.1} parent=39 // pred_region
          %297 = dma.done %s290, 4096
        $region44: #{tpu_custom_call.1} parent=39 // pred_fallthru
          _
        // Predicated region
        $region45: #{tpu_custom_call.1} parent=39 // pred_check
          %p298 = pneg %p82
        $region46: #{tpu_custom_call.1} parent=39 // pred_check_branch
          %300 = sbr.rel (%p298) target = $region48
        $region47: #{tpu_custom_call.1} parent=39 // pred_region
          %301 = dma.done [#allocation9], 1024
        $region48: #{tpu_custom_call.1} parent=39 // pred_fallthru
          _
        // Predicated region
        $region49: #{tpu_custom_call.1} parent=39 // pred_check
          %p302 = pneg %p138
        $region50: #{tpu_custom_call.1} parent=39 // pred_check_branch
          %304 = sbr.rel (%p302) target = $region52
        $region51: #{tpu_custom_call.1} parent=39 // pred_region
          %305 = dma.done [#allocation9], 1024
        $region52: #{tpu_custom_call.1} parent=39 // pred_fallthru
          _
        %s306 = sand.u32 %s41, 1
        %s307 = scalar_lea.sflag [#allocation6], %s306
        %s308 = sand.u32 %s41, 1
        %s309 = smul.addr %s308, 256
        %s310 = scalar_lea.vmem [#allocation5], %s309
        %p311 = pneg %p54
        %p312 = pneg %p51
        %p313 = pneg %p82
        %p314 = pneg %p79
        %s315 = sld [smem:[#allocation3]]
        %p316 = scmp.lt.s32.totalorder %s315, 5
        %s317 = scalar_select %p316, %s315, 5
        %s318 = scalar_lea.vmem %s4, %s317
        %p319 = pneg %p110
        %p320 = pneg %p107
        %p321 = pneg %p138
        %p322 = pneg %p135
        %s323 = sld [smem:[#allocation3 + $0x1]]
        %p324 = scmp.lt.s32.totalorder %s323, 2
        %s325 = scalar_select %p324, %s323, 2
        %s326 = scalar_lea.vmem %s6, %s325
        %p327 = pneg %p166
        %p328 = pneg %p163
        %p329 = pneg %p192
        %p330 = pneg %p189
        %s331 = sand.u32 %s179, 1
        %s332 = scalar_lea.sflag [#allocation7], %s331
        %s333 = sand.u32 %s179, 1
        %s334 = smul.addr %s333, 256
        %s335 = scalar_lea.vmem [#allocation11], %s334
        %s336 = smul.u32 32, %s33
        %s337 = sld [smem:[#allocation3]]
        %s338 = sld [smem:[#allocation3]]
        %p339 = scmp.lt.s32.totalorder %s338, 5
        %s340 = scalar_select %p339, %s338, 5
        %s341 = scalar_lea.vmem %s4, %s340
        %s342 = sld [smem:[#allocation3]]
        %s343 = sld [smem:[#allocation3 + $0x1]]
        %s344 = sld [smem:[#allocation3 + $0x1]]
        %p345 = scmp.lt.s32.totalorder %s344, 2
        %s346 = scalar_select %p345, %s344, 2
        %s347 = scalar_lea.vmem %s6, %s346
        %s348 = sld [smem:[#allocation3 + $0x1]]
        %s349 = smul.u32 32, %s33
        %v351 = vld [vmem:[%s293] sm:$0xff]
        %v352 = vld [vmem:[%s293 + $0x8] sm:$0xff]
        %v353 = vld [vmem:[%s293 + $0x10] sm:$0xff]
        %v354 = vld [vmem:[%s293 + $0x18] sm:$0xff]
        %v355 = vld [vmem:[%s293 + $0x20] sm:$0xff]
        %v356 = vld [vmem:[%s293 + $0x28] sm:$0xff]
        %v357 = vld [vmem:[%s293 + $0x30] sm:$0xff]
        %v358 = vld [vmem:[%s293 + $0x38] sm:$0xff]
        %v359 = vld [vmem:[%s293 + $0x40] sm:$0xff]
        %v360 = vld [vmem:[%s293 + $0x48] sm:$0xff]
        %v361 = vld [vmem:[%s293 + $0x50] sm:$0xff]
        %v362 = vld [vmem:[%s293 + $0x58] sm:$0xff]
        %v363 = vld [vmem:[%s293 + $0x60] sm:$0xff]
        %v364 = vld [vmem:[%s293 + $0x68] sm:$0xff]
        %v365 = vld [vmem:[%s293 + $0x70] sm:$0xff]
        %v366 = vld [vmem:[%s293 + $0x78] sm:$0xff]
        %v367 = vld [vmem:[%s293 + $0x80] sm:$0xff]
        %v368 = vld [vmem:[%s293 + $0x88] sm:$0xff]
        %v369 = vld [vmem:[%s293 + $0x90] sm:$0xff]
        %v370 = vld [vmem:[%s293 + $0x98] sm:$0xff]
        %v371 = vld [vmem:[%s293 + $0xa0] sm:$0xff]
        %v372 = vld [vmem:[%s293 + $0xa8] sm:$0xff]
        %v373 = vld [vmem:[%s293 + $0xb0] sm:$0xff]
        %v374 = vld [vmem:[%s293 + $0xb8] sm:$0xff]
        %v375 = vld [vmem:[%s293 + $0xc0] sm:$0xff]
        %v376 = vld [vmem:[%s293 + $0xc8] sm:$0xff]
        %v377 = vld [vmem:[%s293 + $0xd0] sm:$0xff]
        %v378 = vld [vmem:[%s293 + $0xd8] sm:$0xff]
        %v379 = vld [vmem:[%s293 + $0xe0] sm:$0xff]
        %v380 = vld [vmem:[%s293 + $0xe8] sm:$0xff]
        %v381 = vld [vmem:[%s293 + $0xf0] sm:$0xff]
        %v382 = vld [vmem:[%s293 + $0xf8] sm:$0xff]
        %v383 = vpack.c.bf16 %v352, %v351
        %v384 = vpack.c.bf16 %v354, %v353
        %v385 = vpack.c.bf16 %v356, %v355
        %v386 = vpack.c.bf16 %v358, %v357
        %v387 = vpack.c.bf16 %v360, %v359
        %v388 = vpack.c.bf16 %v362, %v361
        %v389 = vpack.c.bf16 %v364, %v363
        %v390 = vpack.c.bf16 %v366, %v365
        %v391 = vpack.c.bf16 %v368, %v367
        %v392 = vpack.c.bf16 %v370, %v369
        %v393 = vpack.c.bf16 %v372, %v371
        %v394 = vpack.c.bf16 %v374, %v373
        %v395 = vpack.c.bf16 %v376, %v375
        %v396 = vpack.c.bf16 %v378, %v377
        %v397 = vpack.c.bf16 %v380, %v379
        %v398 = vpack.c.bf16 %v382, %v381
        %v399 = vld [vmem:[#allocation8] sm:$0xf]
        %v400 = vld [vmem:[#allocation8 + $0x4] sm:$0xf]
        %v401 = vld [vmem:[#allocation8 + $0x8] sm:$0xf]
        %v402 = vld [vmem:[#allocation8 + $0xc] sm:$0xf]
        %v403 = vld [vmem:[#allocation8 + $0x10] sm:$0xf]
        %v404 = vld [vmem:[#allocation8 + $0x14] sm:$0xf]
        %v405 = vld [vmem:[#allocation8 + $0x18] sm:$0xf]
        %v406 = vld [vmem:[#allocation8 + $0x1c] sm:$0xf]
        %v407 = vld [vmem:[#allocation8 + $0x20] sm:$0xf]
        %v408 = vld [vmem:[#allocation8 + $0x24] sm:$0xf]
        %v409 = vld [vmem:[#allocation8 + $0x28] sm:$0xf]
        %v410 = vld [vmem:[#allocation8 + $0x2c] sm:$0xf]
        %v411 = vld [vmem:[#allocation8 + $0x30] sm:$0xf]
        %v412 = vld [vmem:[#allocation8 + $0x34] sm:$0xf]
        %v413 = vld [vmem:[#allocation8 + $0x38] sm:$0xf]
        %v414 = vld [vmem:[#allocation8 + $0x3c] sm:$0xf]
        %v415 = vld [vmem:[%s341] sm:$0x1]
        %v417 = vlaneseq
        %v418 = vshrl.u32 %v417, 7
        %v419 = vsub.s32 0, %v418
        %v420 = vrot.slane %v415, %v419
        %v438 = vunpack.c.l.b16 %v399
        %v439 = vunpack.c.l.b16 %v400
        %v440 = vunpack.c.l.b16 %v401
        %v441 = vunpack.c.l.b16 %v402
        %v442 = vunpack.c.l.b16 %v403
        %v443 = vunpack.c.l.b16 %v404
        %v444 = vunpack.c.l.b16 %v405
        %v445 = vunpack.c.l.b16 %v406
        %v446 = vunpack.c.l.b16 %v407
        %v447 = vunpack.c.l.b16 %v408
        %v448 = vunpack.c.l.b16 %v409
        %v449 = vunpack.c.l.b16 %v410
        %v450 = vunpack.c.l.b16 %v411
        %v451 = vunpack.c.l.b16 %v412
        %v452 = vunpack.c.l.b16 %v413
        %v453 = vunpack.c.l.b16 %v414
        %v454 = vpack.c.b16 %v439, %v438
        %v455 = vpack.c.b16 %v441, %v440
        %v456 = vpack.c.b16 %v443, %v442
        %v457 = vpack.c.b16 %v445, %v444
        %v458 = vpack.c.b16 %v447, %v446
        %v459 = vpack.c.b16 %v449, %v448
        %v460 = vpack.c.b16 %v451, %v450
        %v461 = vpack.c.b16 %v453, %v452
        %470 = vmatprep.subr.bf16.mxu0 0
        %471 = vmatpush1.bf16.msra.mxu0 %v454
        %472 = vmatprep.subr.bf16.mxu0 0
        %473 = vmatpush1.bf16.msra.mxu0 %v455
        %474 = vmatprep.subr.bf16.mxu0 0
        %475 = vmatpush1.bf16.msra.mxu0 %v456
        %476 = vmatprep.subr.bf16.mxu0 0
        %477 = vmatpush1.bf16.msra.mxu0 %v457
        %478 = vmatprep.subr.bf16.mxu0 0
        %479 = vmatpush1.bf16.msra.mxu0 %v458
        %480 = vmatprep.subr.bf16.mxu0 0
        %481 = vmatpush1.bf16.msra.mxu0 %v459
        %482 = vmatprep.subr.bf16.mxu0 0
        %483 = vmatpush1.bf16.msra.mxu0 %v460
        %484 = vmatprep.subr.bf16.mxu0 0
        %485 = vmatpush1.bf16.msra.mxu0 %v461
        %486 = vmatprep.subr.bf16.mxu0 0
        %487 = vmatpush1.bf16.msra.mxu0 0
        %488 = vmatprep.subr.bf16.mxu0 0
        %489 = vmatpush1.bf16.msra.mxu0 0
        %490 = vmatprep.subr.bf16.mxu0 0
        %491 = vmatpush1.bf16.msra.mxu0 0
        %492 = vmatprep.subr.bf16.mxu0 0
        %493 = vmatpush1.bf16.msra.mxu0 0
        %494 = vmatprep.subr.bf16.mxu0 0
        %495 = vmatpush1.bf16.msra.mxu0 0
        %496 = vmatprep.subr.bf16.mxu0 0
        %497 = vmatpush1.bf16.msra.mxu0 0
        %498 = vmatprep.subr.bf16.mxu0 0
        %499 = vmatpush1.bf16.msra.mxu0 0
        %500 = vmatprep.subr.bf16.mxu0 0
        %501 = vmatpush1.bf16.msra.mxu0 0
        %502 = vmatprep.mubr.bf16.mxu0 0
        %503 = vmatmul.mubr.bf16.gmra.mrb[0].mxu0 %v383
        %v504 = vpop.f32.mrb[0].mxu0
        %v505 = vadd.f32 %v420, %v504
        %v506 = vpop.f32.mrb[0].mxu0
        %v507 = vpop.f32.mrb[0].mxu0
        %v508 = vadd.f32 %v420, %v507
        %v509 = vpop.f32.mrb[0].mxu0
        %510 = vmatprep.mubr.bf16.mxu0 0
        %511 = vmatmul.mubr.bf16.gmra.mrb[0].mxu0 %v384
        %v512 = vpop.f32.mrb[0].mxu0
        %v513 = vadd.f32 %v420, %v512
        %v514 = vpop.f32.mrb[0].mxu0
        %v515 = vpop.f32.mrb[0].mxu0
        %v516 = vadd.f32 %v420, %v515
        %v517 = vpop.f32.mrb[0].mxu0
        %518 = vmatprep.mubr.bf16.mxu0 0
        %519 = vmatmul.mubr.bf16.gmra.mrb[0].mxu0 %v385
        %v520 = vpop.f32.mrb[0].mxu0
        %v521 = vadd.f32 %v420, %v520
        %v522 = vpop.f32.mrb[0].mxu0
        %v523 = vpop.f32.mrb[0].mxu0
        %v524 = vadd.f32 %v420, %v523
        %v525 = vpop.f32.mrb[0].mxu0
        %526 = vmatprep.mubr.bf16.mxu0 0
        %527 = vmatmul.mubr.bf16.gmra.mrb[0].mxu0 %v386
        %v528 = vpop.f32.mrb[0].mxu0
        %v529 = vadd.f32 %v420, %v528
        %v530 = vpop.f32.mrb[0].mxu0
        %v531 = vpop.f32.mrb[0].mxu0
        %v532 = vadd.f32 %v420, %v531
        %v533 = vpop.f32.mrb[0].mxu0
        %534 = vmatprep.mubr.bf16.mxu0 0
        %535 = vmatmul.mubr.bf16.gmra.mrb[0].mxu0 %v387
        %v536 = vpop.f32.mrb[0].mxu0
        %v537 = vadd.f32 %v420, %v536
        %v538 = vpop.f32.mrb[0].mxu0
        %v539 = vpop.f32.mrb[0].mxu0
        %v540 = vadd.f32 %v420, %v539
        %v541 = vpop.f32.mrb[0].mxu0
        %542 = vmatprep.mubr.bf16.mxu0 0
        %543 = vmatmul.mubr.bf16.gmra.mrb[0].mxu0 %v388
        %v544 = vpop.f32.mrb[0].mxu0
        %v545 = vadd.f32 %v420, %v544
        %v546 = vpop.f32.mrb[0].mxu0
        %v547 = vpop.f32.mrb[0].mxu0
        %v548 = vadd.f32 %v420, %v547
        %v549 = vpop.f32.mrb[0].mxu0
        %550 = vmatprep.mubr.bf16.mxu0 0
        %551 = vmatmul.mubr.bf16.gmra.mrb[0].mxu0 %v389
        %v552 = vpop.f32.mrb[0].mxu0
        %v553 = vadd.f32 %v420, %v552
        %v554 = vpop.f32.mrb[0].mxu0
        %v555 = vpop.f32.mrb[0].mxu0
        %v556 = vadd.f32 %v420, %v555
        %v557 = vpop.f32.mrb[0].mxu0
        %558 = vmatprep.mubr.bf16.mxu0 0
        %559 = vmatmul.mubr.bf16.gmra.mrb[0].mxu0 %v390
        %v560 = vpop.f32.mrb[0].mxu0
        %v561 = vadd.f32 %v420, %v560
        %v562 = vpop.f32.mrb[0].mxu0
        %v563 = vpop.f32.mrb[0].mxu0
        %v564 = vadd.f32 %v420, %v563
        %v565 = vpop.f32.mrb[0].mxu0
        %566 = vmatprep.mubr.bf16.mxu0 0
        %567 = vmatmul.mubr.bf16.gmra.mrb[0].mxu0 %v391
        %v568 = vpop.f32.mrb[0].mxu0
        %v569 = vadd.f32 %v420, %v568
        %v570 = vpop.f32.mrb[0].mxu0
        %v571 = vpop.f32.mrb[0].mxu0
        %v572 = vadd.f32 %v420, %v571
        %v573 = vpop.f32.mrb[0].mxu0
        %574 = vmatprep.mubr.bf16.mxu0 0
        %575 = vmatmul.mubr.bf16.gmra.mrb[0].mxu0 %v392
        %v576 = vpop.f32.mrb[0].mxu0
        %v577 = vadd.f32 %v420, %v576
        %v578 = vpop.f32.mrb[0].mxu0
        %v579 = vpop.f32.mrb[0].mxu0
        %v580 = vadd.f32 %v420, %v579
        %v581 = vpop.f32.mrb[0].mxu0
        %582 = vmatprep.mubr.bf16.mxu0 0
        %583 = vmatmul.mubr.bf16.gmra.mrb[0].mxu0 %v393
        %v584 = vpop.f32.mrb[0].mxu0
        %v585 = vadd.f32 %v420, %v584
        %v586 = vpop.f32.mrb[0].mxu0
        %v587 = vpop.f32.mrb[0].mxu0
        %v588 = vadd.f32 %v420, %v587
        %v589 = vpop.f32.mrb[0].mxu0
        %590 = vmatprep.mubr.bf16.mxu0 0
        %591 = vmatmul.mubr.bf16.gmra.mrb[0].mxu0 %v394
        %v592 = vpop.f32.mrb[0].mxu0
        %v593 = vadd.f32 %v420, %v592
        %v594 = vpop.f32.mrb[0].mxu0
        %v595 = vpop.f32.mrb[0].mxu0
        %v596 = vadd.f32 %v420, %v595
        %v597 = vpop.f32.mrb[0].mxu0
        %598 = vmatprep.mubr.bf16.mxu0 0
        %599 = vmatmul.mubr.bf16.gmra.mrb[0].mxu0 %v395
        %v600 = vpop.f32.mrb[0].mxu0
        %v601 = vadd.f32 %v420, %v600
        %v602 = vpop.f32.mrb[0].mxu0
        %v603 = vpop.f32.mrb[0].mxu0
        %v604 = vadd.f32 %v420, %v603
        %v605 = vpop.f32.mrb[0].mxu0
        %606 = vmatprep.mubr.bf16.mxu0 0
        %607 = vmatmul.mubr.bf16.gmra.mrb[0].mxu0 %v396
        %v608 = vpop.f32.mrb[0].mxu0
        %v609 = vadd.f32 %v420, %v608
        %v610 = vpop.f32.mrb[0].mxu0
        %v611 = vpop.f32.mrb[0].mxu0
        %v612 = vadd.f32 %v420, %v611
        %v613 = vpop.f32.mrb[0].mxu0
        %614 = vmatprep.mubr.bf16.mxu0 0
        %615 = vmatmul.mubr.bf16.gmra.mrb[0].mxu0 %v397
        %v616 = vpop.f32.mrb[0].mxu0
        %v617 = vadd.f32 %v420, %v616
        %v618 = vpop.f32.mrb[0].mxu0
        %v619 = vpop.f32.mrb[0].mxu0
        %v620 = vadd.f32 %v420, %v619
        %v621 = vpop.f32.mrb[0].mxu0
        %622 = vmatprep.mubr.bf16.mxu0 0
        %623 = vmatmul.mubr.bf16.gmra.mrb[0].mxu0 %v398
        %v624 = vpop.f32.mrb[0].mxu0
        %v625 = vadd.f32 %v420, %v624
        %v626 = vpop.f32.mrb[0].mxu0
        %v627 = vpop.f32.mrb[0].mxu0
        %v628 = vadd.f32 %v420, %v627
        %v629 = vpop.f32.mrb[0].mxu0
        %630 = vdwg.mxu0
        %s631 = sld [smem:[#allocation4]]
        %v632 = vstv %s631
        %v633 = vmul.f32 %v505, %v632
        %v634 = vmul.f32 %v508, %v632
        %v635 = vmul.f32 %v513, %v632
        %v636 = vmul.f32 %v516, %v632
        %v637 = vmul.f32 %v521, %v632
        %v638 = vmul.f32 %v524, %v632
        %v639 = vmul.f32 %v529, %v632
        %v640 = vmul.f32 %v532, %v632
        %v641 = vmul.f32 %v537, %v632
        %v642 = vmul.f32 %v540, %v632
        %v643 = vmul.f32 %v545, %v632
        %v644 = vmul.f32 %v548, %v632
        %v645 = vmul.f32 %v553, %v632
        %v646 = vmul.f32 %v556, %v632
        %v647 = vmul.f32 %v561, %v632
        %v648 = vmul.f32 %v564, %v632
        %v649 = vmul.f32 %v569, %v632
        %v650 = vmul.f32 %v572, %v632
        %v651 = vmul.f32 %v577, %v632
        %v652 = vmul.f32 %v580, %v632
        %v653 = vmul.f32 %v585, %v632
        %v654 = vmul.f32 %v588, %v632
        %v655 = vmul.f32 %v593, %v632
        %v656 = vmul.f32 %v596, %v632
        %v657 = vmul.f32 %v601, %v632
        %v658 = vmul.f32 %v604, %v632
        %v659 = vmul.f32 %v609, %v632
        %v660 = vmul.f32 %v612, %v632
        %v661 = vmul.f32 %v617, %v632
        %v662 = vmul.f32 %v620, %v632
        %v663 = vmul.f32 %v625, %v632
        %v664 = vmul.f32 %v628, %v632
        %v665 = vpack.c.bf16 %v634, %v633
        %v666 = vpack.c.bf16 %v636, %v635
        %v667 = vpack.c.bf16 %v638, %v637
        %v668 = vpack.c.bf16 %v640, %v639
        %v669 = vpack.c.bf16 %v642, %v641
        %v670 = vpack.c.bf16 %v644, %v643
        %v671 = vpack.c.bf16 %v646, %v645
        %v672 = vpack.c.bf16 %v648, %v647
        %v673 = vpack.c.bf16 %v650, %v649
        %v674 = vpack.c.bf16 %v652, %v651
        %v675 = vpack.c.bf16 %v654, %v653
        %v676 = vpack.c.bf16 %v656, %v655
        %v677 = vpack.c.bf16 %v658, %v657
        %v678 = vpack.c.bf16 %v660, %v659
        %v679 = vpack.c.bf16 %v662, %v661
        %v680 = vpack.c.bf16 %v664, %v663
        %v681 = vld [vmem:[#allocation10] sm:$0xf]
        %v682 = vld [vmem:[#allocation10 + $0x4] sm:$0xf]
        %v683 = vld [vmem:[#allocation10 + $0x8] sm:$0xf]
        %v684 = vld [vmem:[#allocation10 + $0xc] sm:$0xf]
        %v685 = vld [vmem:[#allocation10 + $0x10] sm:$0xf]
        %v686 = vld [vmem:[#allocation10 + $0x14] sm:$0xf]
        %v687 = vld [vmem:[#allocation10 + $0x18] sm:$0xf]
        %v688 = vld [vmem:[#allocation10 + $0x1c] sm:$0xf]
        %v689 = vld [vmem:[#allocation10 + $0x20] sm:$0xf]
        %v690 = vld [vmem:[#allocation10 + $0x24] sm:$0xf]
        %v691 = vld [vmem:[#allocation10 + $0x28] sm:$0xf]
        %v692 = vld [vmem:[#allocation10 + $0x2c] sm:$0xf]
        %v693 = vld [vmem:[#allocation10 + $0x30] sm:$0xf]
        %v694 = vld [vmem:[#allocation10 + $0x34] sm:$0xf]
        %v695 = vld [vmem:[#allocation10 + $0x38] sm:$0xf]
        %v696 = vld [vmem:[#allocation10 + $0x3c] sm:$0xf]
        %v697 = vld [vmem:[%s347] sm:$0x1]
        %v699 = vlaneseq
        %v700 = vshrl.u32 %v699, 7
        %v701 = vsub.s32 0, %v700
        %v702 = vrot.slane %v697, %v701
        %v720 = vunpack.c.l.b16 %v681
        %v721 = vunpack.c.l.b16 %v682
        %v722 = vunpack.c.l.b16 %v683
        %v723 = vunpack.c.l.b16 %v684
        %v724 = vunpack.c.l.b16 %v685
        %v725 = vunpack.c.l.b16 %v686
        %v726 = vunpack.c.l.b16 %v687
        %v727 = vunpack.c.l.b16 %v688
        %v728 = vunpack.c.l.b16 %v689
        %v729 = vunpack.c.l.b16 %v690
        %v730 = vunpack.c.l.b16 %v691
        %v731 = vunpack.c.l.b16 %v692
        %v732 = vunpack.c.l.b16 %v693
        %v733 = vunpack.c.l.b16 %v694
        %v734 = vunpack.c.l.b16 %v695
        %v735 = vunpack.c.l.b16 %v696
        %v736 = vpack.c.b16 %v721, %v720
        %v737 = vpack.c.b16 %v723, %v722
        %v738 = vpack.c.b16 %v725, %v724
        %v739 = vpack.c.b16 %v727, %v726
        %v740 = vpack.c.b16 %v729, %v728
        %v741 = vpack.c.b16 %v731, %v730
        %v742 = vpack.c.b16 %v733, %v732
        %v743 = vpack.c.b16 %v735, %v734
        %752 = vmatprep.subr.bf16.mxu0 0
        %753 = vmatpush1.bf16.msra.mxu0 %v736
        %754 = vmatprep.subr.bf16.mxu0 0
        %755 = vmatpush1.bf16.msra.mxu0 %v737
        %756 = vmatprep.subr.bf16.mxu0 0
        %757 = vmatpush1.bf16.msra.mxu0 %v738
        %758 = vmatprep.subr.bf16.mxu0 0
        %759 = vmatpush1.bf16.msra.mxu0 %v739
        %760 = vmatprep.subr.bf16.mxu0 0
        %761 = vmatpush1.bf16.msra.mxu0 %v740
        %762 = vmatprep.subr.bf16.mxu0 0
        %763 = vmatpush1.bf16.msra.mxu0 %v741
        %764 = vmatprep.subr.bf16.mxu0 0
        %765 = vmatpush1.bf16.msra.mxu0 %v742
        %766 = vmatprep.subr.bf16.mxu0 0
        %767 = vmatpush1.bf16.msra.mxu0 %v743
        %768 = vmatprep.subr.bf16.mxu0 0
        %769 = vmatpush1.bf16.msra.mxu0 0
        %770 = vmatprep.subr.bf16.mxu0 0
        %771 = vmatpush1.bf16.msra.mxu0 0
        %772 = vmatprep.subr.bf16.mxu0 0
        %773 = vmatpush1.bf16.msra.mxu0 0
        %774 = vmatprep.subr.bf16.mxu0 0
        %775 = vmatpush1.bf16.msra.mxu0 0
        %776 = vmatprep.subr.bf16.mxu0 0
        %777 = vmatpush1.bf16.msra.mxu0 0
        %778 = vmatprep.subr.bf16.mxu0 0
        %779 = vmatpush1.bf16.msra.mxu0 0
        %780 = vmatprep.subr.bf16.mxu0 0
        %781 = vmatpush1.bf16.msra.mxu0 0
        %782 = vmatprep.subr.bf16.mxu0 0
        %783 = vmatpush1.bf16.msra.mxu0 0
        %784 = vmatprep.mubr.bf16.mxu0 0
        %785 = vmatmul.mubr.bf16.gmra.mrb[0].mxu0 %v665
        %v786 = vpop.f32.mrb[0].mxu0
        %v787 = vadd.f32 %v702, %v786
        %v788 = vpop.f32.mrb[0].mxu0
        %v789 = vpop.f32.mrb[0].mxu0
        %v790 = vadd.f32 %v702, %v789
        %v791 = vpop.f32.mrb[0].mxu0
        %792 = vmatprep.mubr.bf16.mxu0 0
        %793 = vmatmul.mubr.bf16.gmra.mrb[0].mxu0 %v666
        %v794 = vpop.f32.mrb[0].mxu0
        %v795 = vadd.f32 %v702, %v794
        %v796 = vpop.f32.mrb[0].mxu0
        %v797 = vpop.f32.mrb[0].mxu0
        %v798 = vadd.f32 %v702, %v797
        %v799 = vpop.f32.mrb[0].mxu0
        %800 = vmatprep.mubr.bf16.mxu0 0
        %801 = vmatmul.mubr.bf16.gmra.mrb[0].mxu0 %v667
        %v802 = vpop.f32.mrb[0].mxu0
        %v803 = vadd.f32 %v702, %v802
        %v804 = vpop.f32.mrb[0].mxu0
        %v805 = vpop.f32.mrb[0].mxu0
        %v806 = vadd.f32 %v702, %v805
        %v807 = vpop.f32.mrb[0].mxu0
        %808 = vmatprep.mubr.bf16.mxu0 0
        %809 = vmatmul.mubr.bf16.gmra.mrb[0].mxu0 %v668
        %v810 = vpop.f32.mrb[0].mxu0
        %v811 = vadd.f32 %v702, %v810
        %v812 = vpop.f32.mrb[0].mxu0
        %v813 = vpop.f32.mrb[0].mxu0
        %v814 = vadd.f32 %v702, %v813
        %v815 = vpop.f32.mrb[0].mxu0
        %816 = vmatprep.mubr.bf16.mxu0 0
        %817 = vmatmul.mubr.bf16.gmra.mrb[0].mxu0 %v669
        %v818 = vpop.f32.mrb[0].mxu0
        %v819 = vadd.f32 %v702, %v818
        %v820 = vpop.f32.mrb[0].mxu0
        %v821 = vpop.f32.mrb[0].mxu0
        %v822 = vadd.f32 %v702, %v821
        %v823 = vpop.f32.mrb[0].mxu0
        %824 = vmatprep.mubr.bf16.mxu0 0
        %825 = vmatmul.mubr.bf16.gmra.mrb[0].mxu0 %v670
        %v826 = vpop.f32.mrb[0].mxu0
        %v827 = vadd.f32 %v702, %v826
        %v828 = vpop.f32.mrb[0].mxu0
        %v829 = vpop.f32.mrb[0].mxu0
        %v830 = vadd.f32 %v702, %v829
        %v831 = vpop.f32.mrb[0].mxu0
        %832 = vmatprep.mubr.bf16.mxu0 0
        %833 = vmatmul.mubr.bf16.gmra.mrb[0].mxu0 %v671
        %v834 = vpop.f32.mrb[0].mxu0
        %v835 = vadd.f32 %v702, %v834
        %v836 = vpop.f32.mrb[0].mxu0
        %v837 = vpop.f32.mrb[0].mxu0
        %v838 = vadd.f32 %v702, %v837
        %v839 = vpop.f32.mrb[0].mxu0
        %840 = vmatprep.mubr.bf16.mxu0 0
        %841 = vmatmul.mubr.bf16.gmra.mrb[0].mxu0 %v672
        %v842 = vpop.f32.mrb[0].mxu0
        %v843 = vadd.f32 %v702, %v842
        %v844 = vpop.f32.mrb[0].mxu0
        %v845 = vpop.f32.mrb[0].mxu0
        %v846 = vadd.f32 %v702, %v845
        %v847 = vpop.f32.mrb[0].mxu0
        %848 = vmatprep.mubr.bf16.mxu0 0
        %849 = vmatmul.mubr.bf16.gmra.mrb[0].mxu0 %v673
        %v850 = vpop.f32.mrb[0].mxu0
        %v851 = vadd.f32 %v702, %v850
        %v852 = vpop.f32.mrb[0].mxu0
        %v853 = vpop.f32.mrb[0].mxu0
        %v854 = vadd.f32 %v702, %v853
        %v855 = vpop.f32.mrb[0].mxu0
        %856 = vmatprep.mubr.bf16.mxu0 0
        %857 = vmatmul.mubr.bf16.gmra.mrb[0].mxu0 %v674
        %v858 = vpop.f32.mrb[0].mxu0
        %v859 = vadd.f32 %v702, %v858
        %v860 = vpop.f32.mrb[0].mxu0
        %v861 = vpop.f32.mrb[0].mxu0
        %v862 = vadd.f32 %v702, %v861
        %v863 = vpop.f32.mrb[0].mxu0
        %864 = vmatprep.mubr.bf16.mxu0 0
        %865 = vmatmul.mubr.bf16.gmra.mrb[0].mxu0 %v675
        %v866 = vpop.f32.mrb[0].mxu0
        %v867 = vadd.f32 %v702, %v866
        %v868 = vpop.f32.mrb[0].mxu0
        %v869 = vpop.f32.mrb[0].mxu0
        %v870 = vadd.f32 %v702, %v869
        %v871 = vpop.f32.mrb[0].mxu0
        %872 = vmatprep.mubr.bf16.mxu0 0
        %873 = vmatmul.mubr.bf16.gmra.mrb[0].mxu0 %v676
        %v874 = vpop.f32.mrb[0].mxu0
        %v875 = vadd.f32 %v702, %v874
        %v876 = vpop.f32.mrb[0].mxu0
        %v877 = vpop.f32.mrb[0].mxu0
        %v878 = vadd.f32 %v702, %v877
        %v879 = vpop.f32.mrb[0].mxu0
        %880 = vmatprep.mubr.bf16.mxu0 0
        %881 = vmatmul.mubr.bf16.gmra.mrb[0].mxu0 %v677
        %v882 = vpop.f32.mrb[0].mxu0
        %v883 = vadd.f32 %v702, %v882
        %v884 = vpop.f32.mrb[0].mxu0
        %v885 = vpop.f32.mrb[0].mxu0
        %v886 = vadd.f32 %v702, %v885
        %v887 = vpop.f32.mrb[0].mxu0
        %888 = vmatprep.mubr.bf16.mxu0 0
        %889 = vmatmul.mubr.bf16.gmra.mrb[0].mxu0 %v678
        %v890 = vpop.f32.mrb[0].mxu0
        %v891 = vadd.f32 %v702, %v890
        %v892 = vpop.f32.mrb[0].mxu0
        %v893 = vpop.f32.mrb[0].mxu0
        %v894 = vadd.f32 %v702, %v893
        %v895 = vpop.f32.mrb[0].mxu0
        %896 = vmatprep.mubr.bf16.mxu0 0
        %897 = vmatmul.mubr.bf16.gmra.mrb[0].mxu0 %v679
        %v898 = vpop.f32.mrb[0].mxu0
        %v899 = vadd.f32 %v702, %v898
        %v900 = vpop.f32.mrb[0].mxu0
        %v901 = vpop.f32.mrb[0].mxu0
        %v902 = vadd.f32 %v702, %v901
        %v903 = vpop.f32.mrb[0].mxu0
        %904 = vmatprep.mubr.bf16.mxu0 0
        %905 = vmatmul.mubr.bf16.gmra.mrb[0].mxu0 %v680
        %v906 = vpop.f32.mrb[0].mxu0
        %v907 = vadd.f32 %v702, %v906
        %v908 = vpop.f32.mrb[0].mxu0
        %v909 = vpop.f32.mrb[0].mxu0
        %v910 = vadd.f32 %v702, %v909
        %v911 = vpop.f32.mrb[0].mxu0
        %912 = vdwg.mxu0
        %s913 = sld [smem:[#allocation4 + $0x1]]
        %v914 = vstv %s913
        %v915 = vmul.f32 %v787, %v914
        %v916 = vmul.f32 %v790, %v914
        %v917 = vmul.f32 %v795, %v914
        %v918 = vmul.f32 %v798, %v914
        %v919 = vmul.f32 %v803, %v914
        %v920 = vmul.f32 %v806, %v914
        %v921 = vmul.f32 %v811, %v914
        %v922 = vmul.f32 %v814, %v914
        %v923 = vmul.f32 %v819, %v914
        %v924 = vmul.f32 %v822, %v914
        %v925 = vmul.f32 %v827, %v914
        %v926 = vmul.f32 %v830, %v914
        %v927 = vmul.f32 %v835, %v914
        %v928 = vmul.f32 %v838, %v914
        %v929 = vmul.f32 %v843, %v914
        %v930 = vmul.f32 %v846, %v914
        %v931 = vmul.f32 %v851, %v914
        %v932 = vmul.f32 %v854, %v914
        %v933 = vmul.f32 %v859, %v914
        %v934 = vmul.f32 %v862, %v914
        %v935 = vmul.f32 %v867, %v914
        %v936 = vmul.f32 %v870, %v914
        %v937 = vmul.f32 %v875, %v914
        %v938 = vmul.f32 %v878, %v914
        %v939 = vmul.f32 %v883, %v914
        %v940 = vmul.f32 %v886, %v914
        %v941 = vmul.f32 %v891, %v914
        %v942 = vmul.f32 %v894, %v914
        %v943 = vmul.f32 %v899, %v914
        %v944 = vmul.f32 %v902, %v914
        %v945 = vmul.f32 %v907, %v914
        %v946 = vmul.f32 %v910, %v914
        %947 = vst [vmem:[%s335] sm:$0xff] %v915
        %948 = vst [vmem:[%s335 + $0x8] sm:$0xff] %v916
        %949 = vst [vmem:[%s335 + $0x10] sm:$0xff] %v917
        %950 = vst [vmem:[%s335 + $0x18] sm:$0xff] %v918
        %951 = vst [vmem:[%s335 + $0x20] sm:$0xff] %v919
        %952 = vst [vmem:[%s335 + $0x28] sm:$0xff] %v920
        %953 = vst [vmem:[%s335 + $0x30] sm:$0xff] %v921
        %954 = vst [vmem:[%s335 + $0x38] sm:$0xff] %v922
        %955 = vst [vmem:[%s335 + $0x40] sm:$0xff] %v923
        %956 = vst [vmem:[%s335 + $0x48] sm:$0xff] %v924
        %957 = vst [vmem:[%s335 + $0x50] sm:$0xff] %v925
        %958 = vst [vmem:[%s335 + $0x58] sm:$0xff] %v926
        %959 = vst [vmem:[%s335 + $0x60] sm:$0xff] %v927
        %960 = vst [vmem:[%s335 + $0x68] sm:$0xff] %v928
        %961 = vst [vmem:[%s335 + $0x70] sm:$0xff] %v929
        %962 = vst [vmem:[%s335 + $0x78] sm:$0xff] %v930
        %963 = vst [vmem:[%s335 + $0x80] sm:$0xff] %v931
        %964 = vst [vmem:[%s335 + $0x88] sm:$0xff] %v932
        %965 = vst [vmem:[%s335 + $0x90] sm:$0xff] %v933
        %966 = vst [vmem:[%s335 + $0x98] sm:$0xff] %v934
        %967 = vst [vmem:[%s335 + $0xa0] sm:$0xff] %v935
        %968 = vst [vmem:[%s335 + $0xa8] sm:$0xff] %v936
        %969 = vst [vmem:[%s335 + $0xb0] sm:$0xff] %v937
        %970 = vst [vmem:[%s335 + $0xb8] sm:$0xff] %v938
        %971 = vst [vmem:[%s335 + $0xc0] sm:$0xff] %v939
        %972 = vst [vmem:[%s335 + $0xc8] sm:$0xff] %v940
        %973 = vst [vmem:[%s335 + $0xd0] sm:$0xff] %v941
        %974 = vst [vmem:[%s335 + $0xd8] sm:$0xff] %v942
        %975 = vst [vmem:[%s335 + $0xe0] sm:$0xff] %v943
        %976 = vst [vmem:[%s335 + $0xe8] sm:$0xff] %v944
        %977 = vst [vmem:[%s335 + $0xf0] sm:$0xff] %v945
        %978 = vst [vmem:[%s335 + $0xf8] sm:$0xff] %v946
        %s979 = sand.u32 %s179, 1
        %s980 = scalar_lea.sflag [#allocation7], %s979
        %s981 = sand.u32 %s179, 1
        %s982 = smul.addr %s981, 256
        %s983 = scalar_lea.vmem [#allocation11], %s982
        // Predicated region
        $region53: #{tpu_custom_call.1} parent=39 // pred_check
          %p984 = pneg %p189
        $region54: #{tpu_custom_call.1} parent=39 // pred_check_branch
          %986 = sbr.rel (%p984) target = $region56
        $region55: #{tpu_custom_call.1} parent=39 // pred_region
          %s987 = smul.u32 32, %s33
          %s989 = ssub.s32 4096, 4096
          %990 = vsyncadd %s980, %s989
          %s991 = smul.addr %s987, 128
          %s992 = scalar_lea.hbm %s7, %s991
          %s993 = sshll.u32 %s983, 4
          %s994 = int_to_ptr.vmem [resolvable:$true] %s993
          %999 = dma.vmem_to_hbm [thread:$0]  %s994, 4096, %s992, %s980, 128, 128, 8
        $region56: #{tpu_custom_call.1} parent=39 // pred_fallthru
          _
      $region40: #{tpu_custom_call.1} parent=5 // pred_fallthru
        _
      %p1000 = scmp.le.s32.totalorder 2, %s28
      // Predicated region
      $region57: #{tpu_custom_call.1} parent=5 // pred_check
        %p1001 = pneg %p1000
      $region58: #{tpu_custom_call.1} parent=5 // pred_check_branch
        %1003 = sbr.rel (%p1001) target = $region60
      $region59: #{tpu_custom_call.1} parent=5 // pred_region
        %s1004 = ssub.s32 %s28, 2
        // Predicated region
        $region61: #{tpu_custom_call.1} parent=59 // pred_check
          %p1005 = pneg %p195
        $region62: #{tpu_custom_call.1} parent=59 // pred_check_branch
          %1007 = sbr.rel (%p1005) target = $region64
        $region63: #{tpu_custom_call.1} parent=59 // pred_region
          %s1008 = sand.u32 %s180, 1
          %s1009 = scalar_lea.sflag [#allocation7], %s1008
          %s1010 = sand.u32 %s180, 1
          %s1011 = smul.addr %s1010, 256
          %s1012 = scalar_lea.vmem [#allocation11], %s1011
          %1013 = dma.done %s1009, 4096
        $region64: #{tpu_custom_call.1} parent=59 // pred_fallthru
          _
      $region60: #{tpu_custom_call.1} parent=5 // pred_fallthru
        _
    $region6: #{tpu_custom_call.1} parent=1 // loop_footer
      %s32 = sadd.s32 1, %s28
    $region7: #{tpu_custom_call.1} parent=1 // loop_footer_branch
      %27 = sbr.rel target = $region3
    $region8: #{tpu_custom_call.1} parent=1 // loop_exit
      _
    %1014 = vsyncpa [#allocation6], 1
    %s1015 = scalar_lea.sflag [#allocation6], 1
    %1016 = vsyncpa %s1015, 1
    %1017 = vsyncpa [#allocation9], 1
    %1018 = vsyncpa [#allocation7], 1
    %s1019 = scalar_lea.sflag [#allocation7], 1
    %1020 = vsyncpa %s1019, 1

</llo_original>
